<compile_context>
chip_gen: v7x
topology: tpu7x:2x2x1
jax: 0.10.0
libtpu: 0.0.40
codegen_flags: <defaults>
</compile_context>

<pallas_src>
import functools

import jax
import jax.numpy as jnp
from jax.experimental import pallas as pl
from jax.experimental.pallas import tpu as pltpu


# ---------------------------------------------------------------------------
# Kernel 1: STN3d shared point-MLP (conv1/2/3 + folded BN + ReLU, mean-centering
#           folded into the per-batch layer-1 bias) and global average pool.
#           Layer 1 (K=3) runs on the VPU as rank-1 updates; layers 2/3 on MXU.
# ---------------------------------------------------------------------------
def _stn_pool_kernel(fused_ref, b1_ref, w1_ref, w2_ref, b2_ref, w3_ref, b3_ref,
                     pooled_ref, acc_ref, *, inv_n):
    n = pl.program_id(1)

    @pl.when(n == 0)
    def _init():
        acc_ref[...] = jnp.zeros_like(acc_ref)

    x = fused_ref[0]                                                     # (TN, 3+c_in) bf16
    c = x[:, 0:3].astype(jnp.float32)                                    # raw coords, f32
    w1 = w1_ref[...]                                                     # (3, 64) f32
    # K=3 layer on the VPU (rank-1 multiply-adds); b1 carries the -mean@W1 fold.
    h = (c[:, 0:1] * w1[0:1, :]
         + c[:, 1:2] * w1[1:2, :]
         + c[:, 2:3] * w1[2:3, :])
    h = jnp.maximum(h + b1_ref[0], 0.0)                                  # (TN, 64)

    h = jnp.dot(h.astype(jnp.bfloat16), w2_ref[...],
                preferred_element_type=jnp.float32)
    h = jnp.maximum(h + b2_ref[...], 0.0)                                # (TN, 128)
    h = jnp.dot(h.astype(jnp.bfloat16), w3_ref[...],
                preferred_element_type=jnp.float32)
    h = jnp.maximum(h + b3_ref[...], 0.0)                                # (TN, 256)

    acc_ref[...] += jnp.sum(h, axis=0, keepdims=True)                    # (1, 256)

    @pl.when(n == pl.num_programs(1) - 1)
    def _finish():
        pooled_ref[0] = acc_ref[...] * inv_n


# ---------------------------------------------------------------------------
# Kernel 2: conv1 (fused [coords|feats] input, per-batch trans+mean folded into
#           weight/bias, ReLU) + conv2 (folded BN, no ReLU), global average pool.
#           Emits only the per-batch pooled conv2 feature (B, 1, 256).
# ---------------------------------------------------------------------------
def _conv_pool_kernel(fused_ref, w1e_ref, bc1_ref, w2_ref, b2_ref,
                      pooled_ref, acc_ref, *, inv_n):
    n = pl.program_id(1)

    @pl.when(n == 0)
    def _init():
        acc_ref[...] = jnp.zeros_like(acc_ref)

    x = fused_ref[0]                                                     # (TN, 3+c_in) bf16
    h1 = jnp.dot(x, w1e_ref[0], preferred_element_type=jnp.float32)      # (TN, 128)
    h1 = jnp.maximum(h1 + bc1_ref[0], 0.0)

    h2 = jnp.dot(h1.astype(jnp.bfloat16), w2_ref[...],
                 preferred_element_type=jnp.float32) + b2_ref[...]       # (TN, 256)
    acc_ref[...] += jnp.sum(h2, axis=0, keepdims=True)

    @pl.when(n == pl.num_programs(1) - 1)
    def _finish():
        pooled_ref[0] = acc_ref[...] * inv_n


# ---------------------------------------------------------------------------
# Kernel 3: recompute conv1 (cheap single matmul) and write the fused, lane-dense
#           (TN, 384) output block = [pointfeat | broadcast pooled_xfc].
#           Avoids the intermediate (B, N, 128) pointfeat array and the XLA
#           broadcast_to + concatenate traffic.
# ---------------------------------------------------------------------------
def _concat_out_kernel(fused_ref, w1e_ref, bc1_ref, pooled_ref, out_ref,
                       *, tn, out_dtype):
    x = fused_ref[0]                                                     # (TN, 3+c_in) bf16
    h1 = jnp.dot(x, w1e_ref[0], preferred_element_type=jnp.float32)      # (TN, 128)
    h1 = jnp.maximum(h1 + bc1_ref[0], 0.0)

    avg = jnp.broadcast_to(pooled_ref[0], (tn, 256))                     # (TN, 256)
    out_ref[0] = jnp.concatenate([h1, avg], axis=-1).astype(out_dtype)   # (TN, 384)


# ---------------------------------------------------------------------------
# Wrappers
# ---------------------------------------------------------------------------
def _full_spec(arr):
    zeros = (0,) * arr.ndim
    return pl.BlockSpec(arr.shape, lambda b, n, _z=zeros: _z)


def _cparams(semantics):
    # 48 MiB is safe on v7x (64 MiB physical VMEM); raise toward 64-96 MiB on
    # v5e/v6e (128 MiB physical) when sweeping TN up to 2048-4096.
    return pltpu.CompilerParams(dimension_semantics=semantics,
                                vmem_limit_bytes=48 * 1024 * 1024)


def _stn_pooled(fused, b1_eff, w1, w2, b2, w3, b3, *, tn):
    B, N, cf = fused.shape
    kernel = functools.partial(_stn_pool_kernel, inv_n=1.0 / N)
    pooled = pl.pallas_call(
        kernel,
        out_shape=jax.ShapeDtypeStruct((B, 1, 256), jnp.float32),
        grid_spec=pltpu.PrefetchScalarGridSpec(
            num_scalar_prefetch=0,
            grid=(B, N // tn),
            in_specs=[pl.BlockSpec((1, tn, cf), lambda b, n: (b, n, 0)),
                      pl.BlockSpec((1, 1, 64), lambda b, n: (b, 0, 0)),
                      _full_spec(w1), _full_spec(w2), _full_spec(b2),
                      _full_spec(w3), _full_spec(b3)],
            out_specs=pl.BlockSpec((1, 1, 256), lambda b, n: (b, 0, 0)),
            scratch_shapes=[pltpu.VMEM((1, 256), jnp.float32)],
        ),
        compiler_params=_cparams(("parallel", "arbitrary")),
    )(fused, b1_eff, w1, w2, b2, w3, b3)
    return pooled[:, 0, :]                                               # (B, 256)


def _conv_pooled(fused, w1_eff, bc1_eff, wc2, bc2, *, tn):
    B, N, cf = fused.shape
    kernel = functools.partial(_conv_pool_kernel, inv_n=1.0 / N)
    pooled = pl.pallas_call(
        kernel,
        out_shape=jax.ShapeDtypeStruct((B, 1, 256), jnp.float32),
        grid_spec=pltpu.PrefetchScalarGridSpec(
            num_scalar_prefetch=0,
            grid=(B, N // tn),
            in_specs=[pl.BlockSpec((1, tn, cf), lambda b, n: (b, n, 0)),
                      pl.BlockSpec((1, cf, 128), lambda b, n: (b, 0, 0)),
                      pl.BlockSpec((1, 1, 128), lambda b, n: (b, 0, 0)),
                      _full_spec(wc2), _full_spec(bc2)],
            out_specs=pl.BlockSpec((1, 1, 256), lambda b, n: (b, 0, 0)),
            scratch_shapes=[pltpu.VMEM((1, 256), jnp.float32)],
        ),
        compiler_params=_cparams(("parallel", "arbitrary")),
    )(fused, w1_eff, bc1_eff, wc2, bc2)
    return pooled                                                        # (B, 1, 256)


def _concat_out(fused, w1_eff, bc1_eff, pooled_xfc, *, tn, out_dtype):
    B, N, cf = fused.shape
    kernel = functools.partial(_concat_out_kernel, tn=tn, out_dtype=out_dtype)
    return pl.pallas_call(
        kernel,
        out_shape=jax.ShapeDtypeStruct((B, N, 384), out_dtype),
        grid_spec=pltpu.PrefetchScalarGridSpec(
            num_scalar_prefetch=0,
            grid=(B, N // tn),
            in_specs=[pl.BlockSpec((1, tn, cf), lambda b, n: (b, n, 0)),
                      pl.BlockSpec((1, cf, 128), lambda b, n: (b, 0, 0)),
                      pl.BlockSpec((1, 1, 128), lambda b, n: (b, 0, 0)),
                      pl.BlockSpec((1, 1, 256), lambda b, n: (b, 0, 0))],
            out_specs=pl.BlockSpec((1, tn, 384), lambda b, n: (b, n, 0)),
        ),
        compiler_params=_cparams(("parallel", "parallel")),
    )(fused, w1_eff, bc1_eff, pooled_xfc)


def pointnetfeat_forward(coords, feats, params, *, tn=128, out_dtype=jnp.float32):
    """PointNetfeat.forward on dense (B, N, *) blocks; returns (B, N, 384)."""
    B, N, _ = coords.shape
    c_in = feats.shape[-1]
    assert N % tn == 0 and tn % 8 == 0

    # MinkowskiGlobalPooling of the coords: per-batch mean, folded into layer-1
    # biases below (norm_coords never materialized).
    mean = jnp.mean(coords, axis=1, keepdims=True)                       # (B, 1, 3) f32

    # Fused point input [coords | feats] in bf16: single narrow read shared by
    # all three passes (halves the input traffic vs two f32 arrays).
    fused = jnp.concatenate([coords, feats], axis=-1).astype(jnp.bfloat16)

    # --- STN3d: heavy per-point MLP + pool in Pallas, tiny FC head in JAX ---
    w1, b1, w2, b2, w3, b3 = params["stn_mlp"]
    b1_eff = b1 - jnp.einsum("bij,jk->bik", mean, w1)                    # (B, 1, 64)
    pooled = _stn_pooled(fused, b1_eff, w1, w2, b2, w3, b3, tn=tn)       # (B, 256)

    wf1, b4, wf2, b5, wf3, bf3 = params["stn_head"]                      # BN folded
    g = jax.nn.relu(pooled @ wf1 + b4)                                   # (B, 128)
    g = jax.nn.relu(g @ wf2 + b5)                                        # (B, 64)
    trans = (g @ wf3 + bf3).reshape(B, 3, 3)                             # identity folded

    # --- conv path: fold trans + mean-centering into conv1 (f32 fold, bf16 cast) ---
    wc1, bc1, wc2, bc2 = params["conv"]                                  # wc1 f32 (3+c_in,128)
    w1c, w1f = wc1[:3], wc1[3:]
    w1_eff = jnp.concatenate(
        [jnp.einsum("bij,jk->bik", trans, w1c),
         jnp.broadcast_to(w1f[None], (B, c_in, 128))], axis=1
    ).astype(jnp.bfloat16)                                               # (B, 3+c_in, 128)
    bc1_eff = bc1[None] - jnp.einsum("bij,bjk,kl->bil", mean, trans, w1c)  # (B, 1, 128)

    pooled_xfc = _conv_pooled(fused, w1_eff, bc1_eff, wc2, bc2, tn=tn)   # (B, 1, 256)
    return _concat_out(fused, w1_eff, bc1_eff, pooled_xfc,
                       tn=tn, out_dtype=out_dtype)                       # (B, N, 384)


# ---------------------------------------------------------------------------
# Synthetic parameters (shapes from STN3d / PointNetfeat), eval-mode BN folded
# into the weights; stored pre-transposed as (in, out).
# ---------------------------------------------------------------------------
def make_params(key, in_channels):
    eps = 1e-5

    def linear(key, c_in, c_out):
        return jax.random.normal(key, (c_in, c_out), jnp.float32) * (2.0 / c_in) ** 0.5

    def bn(key, c):
        k1, k2, k3, k4 = jax.random.split(key, 4)
        gamma = 1.0 + 0.1 * jax.random.normal(k1, (1, c), jnp.float32)
        beta = 0.1 * jax.random.normal(k2, (1, c), jnp.float32)
        mean = 0.1 * jax.random.normal(k3, (1, c), jnp.float32)
        var = jnp.abs(1.0 + 0.1 * jax.random.normal(k4, (1, c), jnp.float32))
        scale = gamma / jnp.sqrt(var + eps)
        shift = beta - mean * scale
        return scale, shift

    keys = jax.random.split(key, 16)

    # STN3d point MLP: conv1/2/3 (bias=False) with bn1/2/3 folded into weights.
    # Layer-1 weight stays f32 (VPU path); layers 2/3 stored bf16 (MXU operands).
    w1 = linear(keys[0], 3, 64);     s1, b1 = bn(keys[1], 64)
    w2 = linear(keys[2], 64, 128);   s2, b2 = bn(keys[3], 128)
    w3 = linear(keys[4], 128, 256);  s3, b3 = bn(keys[5], 256)
    stn_mlp = (w1 * s1, b1,
               (w2 * s2).astype(jnp.bfloat16), b2,
               (w3 * s3).astype(jnp.bfloat16), b3)

    # STN3d FC head: fc1/fc2 (bias=False) + bn4/5 folded, fc3 with bias,
    # flattened 3x3 identity folded into the bias.  Runs in plain JAX (f32).
    wf1 = linear(keys[6], 256, 128); s4, b4 = bn(keys[7], 128)
    wf2 = linear(keys[8], 128, 64);  s5, b5 = bn(keys[9], 64)
    wf3 = linear(keys[10], 64, 9)
    bf3 = 0.1 * jax.random.normal(keys[11], (1, 9), jnp.float32)
    ident = jnp.array([[1, 0, 0, 0, 1, 0, 0, 0, 1]], jnp.float32)
    stn_head = (wf1 * s4, b4, wf2 * s5, b5, wf3, bf3 + ident)

    # PointNetfeat conv1 (in_channels+3 -> 128) + bn1 folded: kept in f32 so the
    # per-batch STN transform can be folded in f32 before the bf16 cast.
    # conv2 (128 -> 256) + bn2 folded, stored bf16.
    wc1 = linear(keys[12], 3 + in_channels, 128); sc1, bc1 = bn(keys[13], 128)
    wc2 = linear(keys[14], 128, 256);             sc2, bc2 = bn(keys[15], 256)
    conv = (wc1 * sc1, bc1, (wc2 * sc2).astype(jnp.bfloat16), bc2)

    return {"stn_mlp": stn_mlp, "stn_head": stn_head, "conv": conv}


# ---------------------------------------------------------------------------
# Pure-JAX reference mirroring the kernel's mixed precision (bf16 matmul
# operands, f32 accumulation, bf16 fused input) and the algebraically-exact
# folds (mean-centering into biases, STN transform into conv1 weight).
# Global pooling is a mean (MinkowskiGlobalPooling average), matching the module.
# ---------------------------------------------------------------------------
def pointnetfeat_reference(coords, feats, params):
    B, N, _ = coords.shape
    c_in = feats.shape[-1]

    def mm(a, w):
        return jnp.dot(a.astype(jnp.bfloat16), w.astype(jnp.bfloat16),
                       preferred_element_type=jnp.float32)

    mean = jnp.mean(coords, axis=1, keepdims=True)
    fused = jnp.concatenate([coords, feats], axis=-1).astype(jnp.bfloat16)

    # STN point MLP (layer 1 in f32 like the VPU path, mean folded into bias)
    w1, b1, w2, b2, w3, b3 = params["stn_mlp"]
    c = fused[..., :3].astype(jnp.float32)
    b1_eff = b1 - jnp.einsum("bij,jk->bik", mean, w1)
    h = jax.nn.relu(jnp.einsum("bnd,dk->bnk", c, w1) + b1_eff)
    h = jax.nn.relu(mm(h, w2) + b2)
    h = jax.nn.relu(mm(h, w3) + b3)
    pooled = jnp.mean(h, axis=1)                                         # (B, 256)

    wf1, b4, wf2, b5, wf3, bf3 = params["stn_head"]
    g = jax.nn.relu(pooled @ wf1 + b4)
    g = jax.nn.relu(g @ wf2 + b5)
    trans = (g @ wf3 + bf3).reshape(B, 3, 3)

    wc1, bc1, wc2, bc2 = params["conv"]
    w1c, w1f = wc1[:3], wc1[3:]
    w1_eff = jnp.concatenate([jnp.einsum("bij,jk->bik", trans, w1c),
                              jnp.broadcast_to(w1f[None], (B, c_in, 128))],
                             axis=1).astype(jnp.bfloat16)
    bc1_eff = bc1[None] - jnp.einsum("bij,bjk,kl->bil", mean, trans, w1c)
    pointfeat = jax.nn.relu(
        jnp.einsum("bnd,bdk->bnk", fused, w1_eff,
                   preferred_element_type=jnp.float32) + bc1_eff)        # (B, N, 128)
    xfc = mm(pointfeat, wc2) + bc2                                       # (B, N, 256)
    xf_avg = jnp.broadcast_to(jnp.mean(xfc, axis=1, keepdims=True), (B, N, 256))
    return jnp.concatenate([pointfeat, xf_avg], axis=-1)


if __name__ == "__main__":
    key = jax.random.PRNGKey(0)
    k_c, k_f, k_p = jax.random.split(key, 3)

    B, N, C_IN, TN = 2, 256, 4, 128
    # "coords": Minkowski integer voxel coordinates cast to float.
    coords = jnp.floor(jax.random.uniform(k_c, (B, N, 3), jnp.float32, 0.0, 8.0))
    feats = jax.random.normal(k_f, (B, N, C_IN), jnp.float32)
    params = make_params(k_p, C_IN)

    out = pointnetfeat_forward(coords, feats, params, tn=TN)
    out = jax.block_until_ready(out)

    ref = pointnetfeat_reference(coords, feats, params)
    assert out.shape == (B, N, 128 + 256)
    max_err = jnp.max(jnp.abs(out - ref))
    assert jnp.allclose(out, ref, rtol=2e-2, atol=2e-2), (
        f"mismatch vs reference (max abs err {max_err})")

    print("KERNEL_OK")
</pallas_src>

<mosaic_0001>
module attributes {stable_mosaic.version = 11 : i64} {
  func.func @_stn_pool_kernel(%arg0: i32, %arg1: i32, %arg2: memref<1x128x7xbf16, #tpu.memory_space<vmem>>, %arg3: memref<1x1x64xf32, #tpu.memory_space<vmem>>, %arg4: memref<3x64xf32, #tpu.memory_space<vmem>>, %arg5: memref<64x128xbf16, #tpu.memory_space<vmem>>, %arg6: memref<1x128xf32, #tpu.memory_space<vmem>>, %arg7: memref<128x256xbf16, #tpu.memory_space<vmem>>, %arg8: memref<1x256xf32, #tpu.memory_space<vmem>>, %arg9: memref<1x1x256xf32, #tpu.memory_space<vmem>>, %arg10: memref<1x256xf32, #tpu.memory_space<vmem>>) attributes {dimension_semantics = [#tpu.dimension_semantics<parallel>, #tpu.dimension_semantics<arbitrary>], iteration_bounds = array<i64: 2, 2>, scalar_prefetch = 0 : i64, scratch_operands = 1 : i64, tpu.core_type = #tpu.core_type<tc>, window_params = [{transform_indices = @transform_0, window_bounds = array<i64: 1, 128, 7>}, {transform_indices = @transform_1, window_bounds = array<i64: 1, 1, 64>}, {pipeline_mode = #tpu.pipeline_mode<synchronous>, transform_indices = @transform_2, window_bounds = array<i64: 3, 64>}, {pipeline_mode = #tpu.pipeline_mode<synchronous>, transform_indices = @transform_3, window_bounds = array<i64: 64, 128>}, {pipeline_mode = #tpu.pipeline_mode<synchronous>, transform_indices = @transform_4, window_bounds = array<i64: 1, 128>}, {pipeline_mode = #tpu.pipeline_mode<synchronous>, transform_indices = @transform_5, window_bounds = array<i64: 128, 256>}, {pipeline_mode = #tpu.pipeline_mode<synchronous>, transform_indices = @transform_6, window_bounds = array<i64: 1, 256>}, {transform_indices = @transform_7, window_bounds = array<i64: 1, 1, 256>}]} {
    %c0_i32 = arith.constant 0 : i32
    %0 = arith.cmpi eq, %arg1, %c0_i32 : i32
    %1 = arith.extui %0 : i1 to i32
    %c0_i32_0 = arith.constant 0 : i32
    %2 = arith.cmpi ne, %1, %c0_i32_0 : i32
    scf.if %2 {
      %cst_26 = arith.constant 0.000000e+00 : f32
      %55 = vector.broadcast %cst_26 : f32 to vector<1x256xf32>
      %c0_27 = arith.constant 0 : index
      %c0_28 = arith.constant 0 : index
      %56 = vector.load %arg10[%c0_27, %c0_28] : memref<1x256xf32, #tpu.memory_space<vmem>>, vector<1x256xf32>
      tpu.vector_store %arg10[%c0_27, %c0_28], %55 {strides = array<i32>} : memref<1x256xf32, #tpu.memory_space<vmem>>, vector<1x256xf32>,
    } else {
    }
    %c0 = arith.constant 0 : index
    %c0_1 = arith.constant 0 : index
    %c0_2 = arith.constant 0 : index
    %3 = vector.load %arg2[%c0, %c0_1, %c0_2] : memref<1x128x7xbf16, #tpu.memory_space<vmem>>, vector<1x128x7xbf16>
    %4 = vector.shape_cast %3 : vector<1x128x7xbf16> to vector<128x7xbf16>
    %5 = vector.extract_strided_slice %4 {offsets = [0, 0], sizes = [128, 3], strides = [1, 1]} : vector<128x7xbf16> to vector<128x3xbf16>
    %6 = arith.extf %5 : vector<128x3xbf16> to vector<128x3xf32>
    %c0_3 = arith.constant 0 : index
    %c0_4 = arith.constant 0 : index
    %7 = vector.load %arg4[%c0_3, %c0_4] : memref<3x64xf32, #tpu.memory_space<vmem>>, vector<3x64xf32>
    %8 = vector.extract_strided_slice %6 {offsets = [0, 0], sizes = [128, 1], strides = [1, 1]} : vector<128x3xf32> to vector<128x1xf32>
    %9 = vector.extract_strided_slice %7 {offsets = [0, 0], sizes = [1, 64], strides = [1, 1]} : vector<3x64xf32> to vector<1x64xf32>
    %10 = vector.broadcast %8 : vector<128x1xf32> to vector<128x64xf32>
    %11 = vector.broadcast %9 : vector<1x64xf32> to vector<128x64xf32>
    %12 = arith.mulf %10, %11 : vector<128x64xf32>
    %13 = vector.extract_strided_slice %6 {offsets = [0, 1], sizes = [128, 1], strides = [1, 1]} : vector<128x3xf32> to vector<128x1xf32>
    %14 = vector.extract_strided_slice %7 {offsets = [1, 0], sizes = [1, 64], strides = [1, 1]} : vector<3x64xf32> to vector<1x64xf32>
    %15 = vector.broadcast %13 : vector<128x1xf32> to vector<128x64xf32>
    %16 = vector.broadcast %14 : vector<1x64xf32> to vector<128x64xf32>
    %17 = arith.mulf %15, %16 : vector<128x64xf32>
    %18 = arith.addf %12, %17 : vector<128x64xf32>
    %19 = vector.extract_strided_slice %6 {offsets = [0, 2], sizes = [128, 1], strides = [1, 1]} : vector<128x3xf32> to vector<128x1xf32>
    %20 = vector.extract_strided_slice %7 {offsets = [2, 0], sizes = [1, 64], strides = [1, 1]} : vector<3x64xf32> to vector<1x64xf32>
    %21 = vector.broadcast %19 : vector<128x1xf32> to vector<128x64xf32>
    %22 = vector.broadcast %20 : vector<1x64xf32> to vector<128x64xf32>
    %23 = arith.mulf %21, %22 : vector<128x64xf32>
    %24 = arith.addf %18, %23 : vector<128x64xf32>
    %c0_5 = arith.constant 0 : index
    %c0_6 = arith.constant 0 : index
    %c0_7 = arith.constant 0 : index
    %25 = vector.load %arg3[%c0_5, %c0_6, %c0_7] : memref<1x1x64xf32, #tpu.memory_space<vmem>>, vector<1x1x64xf32>
    %26 = vector.shape_cast %25 : vector<1x1x64xf32> to vector<1x64xf32>
    %27 = vector.broadcast %26 : vector<1x64xf32> to vector<128x64xf32>
    %28 = arith.addf %24, %27 : vector<128x64xf32>
    %cst = arith.constant 0.000000e+00 : f32
    %29 = vector.broadcast %cst : f32 to vector<128x64xf32>
    %30 = arith.maximumf %28, %29 : vector<128x64xf32>
    %31 = arith.truncf %30 : vector<128x64xf32> to vector<128x64xbf16>
    %c0_8 = arith.constant 0 : index
    %c0_9 = arith.constant 0 : index
    %32 = vector.load %arg5[%c0_8, %c0_9] : memref<64x128xbf16, #tpu.memory_space<vmem>>, vector<64x128xbf16>
    %cst_10 = arith.constant dense<0.000000e+00> : vector<128x128xf32>
    %33 = tpu.matmul %31, %32, %cst_10 {dimension_numbers = #tpu.dot_dimension_numbers<[1], [0], [0], [1], [0, 0, 1, 1], [], []>} : vector<128x64xbf16>, vector<64x128xbf16>, vector<128x128xf32> -> vector<128x128xf32>
    %c0_11 = arith.constant 0 : index
    %c0_12 = arith.constant 0 : index
    %34 = vector.load %arg6[%c0_11, %c0_12] : memref<1x128xf32, #tpu.memory_space<vmem>>, vector<1x128xf32>
    %35 = vector.broadcast %34 : vector<1x128xf32> to vector<128x128xf32>
    %36 = arith.addf %33, %35 : vector<128x128xf32>
    %cst_13 = arith.constant 0.000000e+00 : f32
    %37 = vector.broadcast %cst_13 : f32 to vector<128x128xf32>
    %38 = arith.maximumf %36, %37 : vector<128x128xf32>
    %39 = arith.truncf %38 : vector<128x128xf32> to vector<128x128xbf16>
    %c0_14 = arith.constant 0 : index
    %c0_15 = arith.constant 0 : index
    %40 = vector.load %arg7[%c0_14, %c0_15] : memref<128x256xbf16, #tpu.memory_space<vmem>>, vector<128x256xbf16>
    %cst_16 = arith.constant dense<0.000000e+00> : vector<128x256xf32>
    %41 = tpu.matmul %39, %40, %cst_16 {dimension_numbers = #tpu.dot_dimension_numbers<[1], [0], [0], [1], [0, 0, 1, 1], [], []>} : vector<128x128xbf16>, vector<128x256xbf16>, vector<128x256xf32> -> vector<128x256xf32>
    %c0_17 = arith.constant 0 : index
    %c0_18 = arith.constant 0 : index
    %42 = vector.load %arg8[%c0_17, %c0_18] : memref<1x256xf32, #tpu.memory_space<vmem>>, vector<1x256xf32>
    %43 = vector.broadcast %42 : vector<1x256xf32> to vector<128x256xf32>
    %44 = arith.addf %41, %43 : vector<128x256xf32>
    %cst_19 = arith.constant 0.000000e+00 : f32
    %45 = vector.broadcast %cst_19 : f32 to vector<128x256xf32>
    %46 = arith.maximumf %44, %45 : vector<128x256xf32>
    %c0_20 = arith.constant 0 : index
    %c0_21 = arith.constant 0 : index
    %47 = vector.load %arg10[%c0_20, %c0_21] : memref<1x256xf32, #tpu.memory_space<vmem>>, vector<1x256xf32>
    %cst_22 = arith.constant dense<0.000000e+00> : vector<256xf32>
    %48 = vector.multi_reduction <add>, %46, %cst_22 [0] : vector<128x256xf32> to vector<256xf32>
    %49 = vector.shape_cast %48 : vector<256xf32> to vector<1x256xf32>
    %50 = arith.addf %47, %49 : vector<1x256xf32>
    %c0_23 = arith.constant 0 : index
    %c0_24 = arith.constant 0 : index
    %51 = vector.load %arg10[%c0_23, %c0_24] : memref<1x256xf32, #tpu.memory_space<vmem>>, vector<1x256xf32>
    tpu.vector_store %arg10[%c0_23, %c0_24], %50 {strides = array<i32>} : memref<1x256xf32, #tpu.memory_space<vmem>>, vector<1x256xf32>,
    %c1_i32 = arith.constant 1 : i32
    %52 = arith.cmpi eq, %arg1, %c1_i32 : i32
    %53 = arith.extui %52 : i1 to i32
    %c0_i32_25 = arith.constant 0 : i32
    %54 = arith.cmpi ne, %53, %c0_i32_25 : i32
    scf.if %54 {
      %c0_26 = arith.constant 0 : index
      %c0_27 = arith.constant 0 : index
      %55 = vector.load %arg10[%c0_26, %c0_27] : memref<1x256xf32, #tpu.memory_space<vmem>>, vector<1x256xf32>
      %cst_28 = arith.constant 3.906250e-03 : f32
      %56 = vector.broadcast %cst_28 : f32 to vector<1x256xf32>
      %57 = arith.mulf %55, %56 : vector<1x256xf32>
      %c0_29 = arith.constant 0 : index
      %c0_30 = arith.constant 0 : index
      %c0_31 = arith.constant 0 : index
      %58 = vector.load %arg9[%c0_29, %c0_30, %c0_31] : memref<1x1x256xf32, #tpu.memory_space<vmem>>, vector<1x1x256xf32>
      %59 = vector.shape_cast %58 : vector<1x1x256xf32> to vector<1x256xf32>
      %60 = vector.shape_cast %57 : vector<1x256xf32> to vector<1x1x256xf32>
      tpu.vector_store %arg9[%c0_29, %c0_30, %c0_31], %60 {strides = array<i32>} : memref<1x1x256xf32, #tpu.memory_space<vmem>>, vector<1x1x256xf32>,
    } else {
    }
    return
  }
  func.func @transform_0(%arg0: i32, %arg1: i32) -> (i32, i32, i32) {
    %c0_i32 = arith.constant 0 : i32
    %c0_i32_0 = arith.constant 0 : i32
    return %arg0, %arg1, %c0_i32 : i32, i32, i32
  }
  func.func @transform_1(%arg0: i32, %arg1: i32) -> (i32, i32, i32) {
    %c0_i32 = arith.constant 0 : i32
    %c0_i32_0 = arith.constant 0 : i32
    %c0_i32_1 = arith.constant 0 : i32
    return %arg0, %c0_i32, %c0_i32_0 : i32, i32, i32
  }
  func.func @transform_2(%arg0: i32, %arg1: i32) -> (i32, i32) {
    %c0_i32 = arith.constant 0 : i32
    %c0_i32_0 = arith.constant 0 : i32
    %c0_i32_1 = arith.constant 0 : i32
    return %c0_i32, %c0_i32_0 : i32, i32
  }
  func.func @transform_3(%arg0: i32, %arg1: i32) -> (i32, i32) {
    %c0_i32 = arith.constant 0 : i32
    %c0_i32_0 = arith.constant 0 : i32
    %c0_i32_1 = arith.constant 0 : i32
    return %c0_i32, %c0_i32_0 : i32, i32
  }
  func.func @transform_4(%arg0: i32, %arg1: i32) -> (i32, i32) {
    %c0_i32 = arith.constant 0 : i32
    %c0_i32_0 = arith.constant 0 : i32
    %c0_i32_1 = arith.constant 0 : i32
    return %c0_i32, %c0_i32_0 : i32, i32
  }
  func.func @transform_5(%arg0: i32, %arg1: i32) -> (i32, i32) {
    %c0_i32 = arith.constant 0 : i32
    %c0_i32_0 = arith.constant 0 : i32
    %c0_i32_1 = arith.constant 0 : i32
    return %c0_i32, %c0_i32_0 : i32, i32
  }
  func.func @transform_6(%arg0: i32, %arg1: i32) -> (i32, i32) {
    %c0_i32 = arith.constant 0 : i32
    %c0_i32_0 = arith.constant 0 : i32
    %c0_i32_1 = arith.constant 0 : i32
    return %c0_i32, %c0_i32_0 : i32, i32
  }
  func.func @transform_7(%arg0: i32, %arg1: i32) -> (i32, i32, i32) {
    %c0_i32 = arith.constant 0 : i32
    %c0_i32_0 = arith.constant 0 : i32
    %c0_i32_1 = arith.constant 0 : i32
    return %arg0, %c0_i32, %c0_i32_0 : i32, i32, i32
  }
}

</mosaic_0001>

<llo_original>
// kernel: tpu_custom_call.1
$region0: #{tpu_custom_call.1}
  #allocation0 [shape = 'u32[]', space=smem, size = 0x4, offset = 0x4, fixed_abs, tag = 'smem constant byte address 0x4 - core index']
  #allocation1 [shape = 'u32[144,128]{1,0:T(1,128)}', space=vmem, size = 0x12000, scoped, tag = 'internal scratch']
  #allocation2 [shape = 'f32[1,256]{1,0:T(1,128)}', space=vmem, size = 0x400, scoped, tag = 'scratch operand']
  %s0 = inlined_call_operand.vmem [shape: bf16[2,256,7], index: 0, kind: input, shape index: {}]
  %s1 = inlined_call_operand.vmem [shape: f32[2,1,64], index: 1, kind: input, shape index: {}]
  %s2 = inlined_call_operand.vmem [shape: f32[3,64], index: 2, kind: input, shape index: {}]
  %s3 = inlined_call_operand.vmem [shape: bf16[64,128], index: 3, kind: input, shape index: {}]
  %s4 = inlined_call_operand.vmem [shape: f32[1,128], index: 4, kind: input, shape index: {}]
  %s5 = inlined_call_operand.vmem [shape: bf16[128,256], index: 5, kind: input, shape index: {}]
  %s6 = inlined_call_operand.vmem [shape: f32[1,256], index: 6, kind: input, shape index: {}]
  %s7 = inlined_call_operand.hbm [shape: f32[2,1,256], index: 7, kind: output, shape index: {}]
  %s8 = sld [smem:[#allocation0]]
  $region69: #{tpu_custom_call.1} parent=0
    _
  %s10 = ssub.s32 1, %s8
  %s11 = scalar_select 0, %s10, %s8
  $region1: #{tpu_custom_call.1} parent=0
    #allocation3 [shape = 'u8[2048]{0}', space=vmem, size = 0x800, scoped, tag = 'output window, operand 0']
    #allocation4 [shape = 's32[2]{0}', space=sflag, size = 0x8, scoped, tag = 'scoped memory for tpu_custom_call.1']
    %12 = vsyncpa [#allocation4], 0
    %s13 = scalar_lea.sflag [#allocation4], 1
    %14 = vsyncpa %s13, 0
    loop: start=0, step=1, limit=6
    $region2: #{tpu_custom_call.1} parent=1 // loop_pre_header
      _
    $region3: #{tpu_custom_call.1} parent=1 // loop_header
      %s16 = sphi 0, %s20
      %p17 = scmp.ge.s32.totalorder %s16, 6
      %s23 = sphi 0, %s35
      %s24 = sphi 0, %s31
      %s25 = sphi 0, %s23
      %s26 = sphi 0, %s24
      %s27 = sphi 0, %s25
      %s28 = sphi 0, %s26
      %s40 = sphi 0, %s42
      %s43 = sphi 0, %s40
      %s44 = sphi 0, %s43
      %s60 = sphi 0, %s44
      %s66 = sphi 0, %s68
      %s69 = sphi 0, %s66
      %s70 = sphi 0, %s69
      %s86 = sphi 0, %s70
      %s90 = sphi 0, %s90
      %s92 = sphi 0, %s90
      %s93 = sphi 0, %s92
      %s107 = sphi 0, %s93
      %s111 = sphi 0, %s111
      %s113 = sphi 0, %s111
      %s114 = sphi 0, %s113
      %s128 = sphi 0, %s114
      %s132 = sphi 0, %s132
      %s134 = sphi 0, %s132
      %s135 = sphi 0, %s134
      %s149 = sphi 0, %s135
      %s153 = sphi 0, %s153
      %s155 = sphi 0, %s153
      %s156 = sphi 0, %s155
      %s170 = sphi 0, %s156
      %s174 = sphi 0, %s174
      %s176 = sphi 0, %s174
      %s177 = sphi 0, %s176
      %s191 = sphi 0, %s177
      %s197 = sphi 0, %s199
      %s200 = sphi 0, %s197
      %s201 = sphi 0, %s200
      %s217 = sphi 0, %s201
    $region4: #{tpu_custom_call.1} parent=1 // loop_header_branch
      %19 = sbr.rel (%p17) target = $region8
    $region5: #{tpu_custom_call.1} parent=1 // loop_body
      %s21 = ssub.s32 %s16, 1
      %s22 = ssub.s32 %s16, 2
      %s29 = sadd.s32 1, %s24
      %p30 = scmp.ge.s32.totalorder %s29, 2
      %s31 = scalar_select %p30, 0, %s29
      %s32 = sadd.s32 1, %s23
      %s33 = scalar_select %p30, %s32, %s23
      %p34 = scmp.ge.s32.totalorder %s33, 2
      %s35 = scalar_select %p34, 0, %s33
      %s36 = ssub.s32 %s23, %s35
      %s37 = ssub.s32 %s24, %s31
      %s38 = sor.u32 %s36, %s37
      %p39 = scmp.eq.s32.totalorder %s38, 0
      %s41 = sadd.s32 %s40, 1
      %s42 = scalar_select %p39, %s40, %s41
      %p45 = pneg %p39
      %p46 = scmp.eq.s32.totalorder %s16, 3
      %p47 = por %p45, %p46
      %p48 = scmp.ne.s32.totalorder %s40, %s43
      %p49 = scmp.eq.s32.totalorder %s16, 0
      %p50 = por %p48, %p49
      %p51 = scmp.ne.s32.totalorder %s40, %s43
      %p52 = scmp.eq.s32.totalorder %s21, 3
      %p53 = por %p51, %p52
      %p54 = scmp.ne.s32.totalorder %s43, %s44
      %p55 = scmp.eq.s32.totalorder %s21, 0
      %p56 = por %p54, %p55
      %p57 = scmp.ne.s32.totalorder %s43, %s44
      %p58 = scmp.eq.s32.totalorder %s22, 3
      %p59 = por %p57, %p58
      %p61 = scmp.ne.s32.totalorder %s44, %s60
      %p62 = scmp.eq.s32.totalorder %s22, 0
      %p63 = por %p61, %p62
      %s64 = ssub.s32 %s23, %s35
      %p65 = scmp.eq.s32.totalorder %s64, 0
      %s67 = sadd.s32 %s66, 1
      %s68 = scalar_select %p65, %s66, %s67
      %p71 = pneg %p65
      %p72 = scmp.eq.s32.totalorder %s16, 3
      %p73 = por %p71, %p72
      %p74 = scmp.ne.s32.totalorder %s66, %s69
      %p75 = scmp.eq.s32.totalorder %s16, 0
      %p76 = por %p74, %p75
      %p77 = scmp.ne.s32.totalorder %s66, %s69
      %p78 = scmp.eq.s32.totalorder %s21, 3
      %p79 = por %p77, %p78
      %p80 = scmp.ne.s32.totalorder %s69, %s70
      %p81 = scmp.eq.s32.totalorder %s21, 0
      %p82 = por %p80, %p81
      %p83 = scmp.ne.s32.totalorder %s69, %s70
      %p84 = scmp.eq.s32.totalorder %s22, 3
      %p85 = por %p83, %p84
      %p87 = scmp.ne.s32.totalorder %s70, %s86
      %p88 = scmp.eq.s32.totalorder %s22, 0
      %p89 = por %p87, %p88
      %s91 = sadd.s32 %s90, 1
      %p94 = scmp.eq.s32.totalorder %s16, 3
      %p95 = scmp.ne.s32.totalorder %s90, %s92
      %p96 = scmp.eq.s32.totalorder %s16, 0
      %p97 = por %p95, %p96
      %p98 = scmp.ne.s32.totalorder %s90, %s92
      %p99 = scmp.eq.s32.totalorder %s21, 3
      %p100 = por %p98, %p99
      %p101 = scmp.ne.s32.totalorder %s92, %s93
      %p102 = scmp.eq.s32.totalorder %s21, 0
      %p103 = por %p101, %p102
      %p104 = scmp.ne.s32.totalorder %s92, %s93
      %p105 = scmp.eq.s32.totalorder %s22, 3
      %p106 = por %p104, %p105
      %p108 = scmp.ne.s32.totalorder %s93, %s107
      %p109 = scmp.eq.s32.totalorder %s22, 0
      %p110 = por %p108, %p109
      %s112 = sadd.s32 %s111, 1
      %p115 = scmp.eq.s32.totalorder %s16, 3
      %p116 = scmp.ne.s32.totalorder %s111, %s113
      %p117 = scmp.eq.s32.totalorder %s16, 0
      %p118 = por %p116, %p117
      %p119 = scmp.ne.s32.totalorder %s111, %s113
      %p120 = scmp.eq.s32.totalorder %s21, 3
      %p121 = por %p119, %p120
      %p122 = scmp.ne.s32.totalorder %s113, %s114
      %p123 = scmp.eq.s32.totalorder %s21, 0
      %p124 = por %p122, %p123
      %p125 = scmp.ne.s32.totalorder %s113, %s114
      %p126 = scmp.eq.s32.totalorder %s22, 3
      %p127 = por %p125, %p126
      %p129 = scmp.ne.s32.totalorder %s114, %s128
      %p130 = scmp.eq.s32.totalorder %s22, 0
      %p131 = por %p129, %p130
      %s133 = sadd.s32 %s132, 1
      %p136 = scmp.eq.s32.totalorder %s16, 3
      %p137 = scmp.ne.s32.totalorder %s132, %s134
      %p138 = scmp.eq.s32.totalorder %s16, 0
      %p139 = por %p137, %p138
      %p140 = scmp.ne.s32.totalorder %s132, %s134
      %p141 = scmp.eq.s32.totalorder %s21, 3
      %p142 = por %p140, %p141
      %p143 = scmp.ne.s32.totalorder %s134, %s135
      %p144 = scmp.eq.s32.totalorder %s21, 0
      %p145 = por %p143, %p144
      %p146 = scmp.ne.s32.totalorder %s134, %s135
      %p147 = scmp.eq.s32.totalorder %s22, 3
      %p148 = por %p146, %p147
      %p150 = scmp.ne.s32.totalorder %s135, %s149
      %p151 = scmp.eq.s32.totalorder %s22, 0
      %p152 = por %p150, %p151
      %s154 = sadd.s32 %s153, 1
      %p157 = scmp.eq.s32.totalorder %s16, 3
      %p158 = scmp.ne.s32.totalorder %s153, %s155
      %p159 = scmp.eq.s32.totalorder %s16, 0
      %p160 = por %p158, %p159
      %p161 = scmp.ne.s32.totalorder %s153, %s155
      %p162 = scmp.eq.s32.totalorder %s21, 3
      %p163 = por %p161, %p162
      %p164 = scmp.ne.s32.totalorder %s155, %s156
      %p165 = scmp.eq.s32.totalorder %s21, 0
      %p166 = por %p164, %p165
      %p167 = scmp.ne.s32.totalorder %s155, %s156
      %p168 = scmp.eq.s32.totalorder %s22, 3
      %p169 = por %p167, %p168
      %p171 = scmp.ne.s32.totalorder %s156, %s170
      %p172 = scmp.eq.s32.totalorder %s22, 0
      %p173 = por %p171, %p172
      %s175 = sadd.s32 %s174, 1
      %p178 = scmp.eq.s32.totalorder %s16, 3
      %p179 = scmp.ne.s32.totalorder %s174, %s176
      %p180 = scmp.eq.s32.totalorder %s16, 0
      %p181 = por %p179, %p180
      %p182 = scmp.ne.s32.totalorder %s174, %s176
      %p183 = scmp.eq.s32.totalorder %s21, 3
      %p184 = por %p182, %p183
      %p185 = scmp.ne.s32.totalorder %s176, %s177
      %p186 = scmp.eq.s32.totalorder %s21, 0
      %p187 = por %p185, %p186
      %p188 = scmp.ne.s32.totalorder %s176, %s177
      %p189 = scmp.eq.s32.totalorder %s22, 3
      %p190 = por %p188, %p189
      %p192 = scmp.ne.s32.totalorder %s177, %s191
      %p193 = scmp.eq.s32.totalorder %s22, 0
      %p194 = por %p192, %p193
      %s195 = ssub.s32 %s23, %s35
      %p196 = scmp.eq.s32.totalorder %s195, 0
      %s198 = sadd.s32 %s197, 1
      %s199 = scalar_select %p196, %s197, %s198
      %p202 = pneg %p196
      %p203 = scmp.eq.s32.totalorder %s16, 3
      %p204 = por %p202, %p203
      %p205 = scmp.ne.s32.totalorder %s197, %s200
      %p206 = scmp.eq.s32.totalorder %s16, 0
      %p207 = por %p205, %p206
      %p208 = scmp.ne.s32.totalorder %s197, %s200
      %p209 = scmp.eq.s32.totalorder %s21, 3
      %p210 = por %p208, %p209
      %p211 = scmp.ne.s32.totalorder %s200, %s201
      %p212 = scmp.eq.s32.totalorder %s21, 0
      %p213 = por %p211, %p212
      %p214 = scmp.ne.s32.totalorder %s200, %s201
      %p215 = scmp.eq.s32.totalorder %s22, 3
      %p216 = por %p214, %p215
      %p218 = scmp.ne.s32.totalorder %s201, %s217
      %p219 = scmp.eq.s32.totalorder %s22, 0
      %p220 = por %p218, %p219
      %p221 = scmp.le.s32.totalorder 1, %s16
      %p222 = scmp.lt.s32.totalorder %s16, 5
      %p223 = pnand %p221, %p222
      %p224 = pneg %p223
      // Predicated region
      $region9: #{tpu_custom_call.1} parent=5 // pred_check
        _
      $region10: #{tpu_custom_call.1} parent=5 // pred_check_branch
        %226 = sbr.rel (%p223) target = $region12
      $region11: #{tpu_custom_call.1} parent=5 // pred_region
        %s227 = ssub.s32 %s16, 1
        // Predicated region
        $region13: #{tpu_custom_call.1} parent=11 // pred_check
          %p228 = pneg %p103
        $region14: #{tpu_custom_call.1} parent=11 // pred_check_branch
          %230 = sbr.rel (%p228) target = $region16
        $region15: #{tpu_custom_call.1} parent=11 // pred_region
          _
        $region16: #{tpu_custom_call.1} parent=11 // pred_fallthru
          _
        // Predicated region
        $region17: #{tpu_custom_call.1} parent=11 // pred_check
          %p231 = pneg %p124
        $region18: #{tpu_custom_call.1} parent=11 // pred_check_branch
          %233 = sbr.rel (%p231) target = $region20
        $region19: #{tpu_custom_call.1} parent=11 // pred_region
          _
        $region20: #{tpu_custom_call.1} parent=11 // pred_fallthru
          _
        // Predicated region
        $region21: #{tpu_custom_call.1} parent=11 // pred_check
          %p234 = pneg %p145
        $region22: #{tpu_custom_call.1} parent=11 // pred_check_branch
          %236 = sbr.rel (%p234) target = $region24
        $region23: #{tpu_custom_call.1} parent=11 // pred_region
          _
        $region24: #{tpu_custom_call.1} parent=11 // pred_fallthru
          _
        // Predicated region
        $region25: #{tpu_custom_call.1} parent=11 // pred_check
          %p237 = pneg %p166
        $region26: #{tpu_custom_call.1} parent=11 // pred_check_branch
          %239 = sbr.rel (%p237) target = $region28
        $region27: #{tpu_custom_call.1} parent=11 // pred_region
          _
        $region28: #{tpu_custom_call.1} parent=11 // pred_fallthru
          _
        // Predicated region
        $region29: #{tpu_custom_call.1} parent=11 // pred_check
          %p240 = pneg %p187
        $region30: #{tpu_custom_call.1} parent=11 // pred_check_branch
          %242 = sbr.rel (%p240) target = $region32
        $region31: #{tpu_custom_call.1} parent=11 // pred_region
          _
        $region32: #{tpu_custom_call.1} parent=11 // pred_fallthru
          _
      $region12: #{tpu_custom_call.1} parent=5 // pred_fallthru
        _
      %p243 = scmp.lt.s32.totalorder %s16, 4
      // Predicated region
      $region33: #{tpu_custom_call.1} parent=5 // pred_check
        %p244 = pneg %p243
      $region34: #{tpu_custom_call.1} parent=5 // pred_check_branch
        %246 = sbr.rel (%p244) target = $region36
      $region35: #{tpu_custom_call.1} parent=5 // pred_region
        // Predicated region
        $region37: #{tpu_custom_call.1} parent=35 // pred_check
          %p247 = pneg %p50
        $region38: #{tpu_custom_call.1} parent=35 // pred_check_branch
          %249 = sbr.rel (%p247) target = $region40
        $region39: #{tpu_custom_call.1} parent=35 // pred_region
          %s250 = smul.u32 16, %s24
          %p251 = scmp.lt.s32.totalorder %s23, 1
          %s252 = scalar_select %p251, %s23, 1
          %p253 = scmp.lt.s32.totalorder %s250, 31
          %s254 = scalar_select %p253, %s250, 31
          %s255 = smul.addr %s252, 32
          %s256 = sadd.s32 %s254, %s255
          %s257 = smul.addr %s256, 4
          %s258 = scalar_lea.vmem %s0, %s257
          %s259 = smul.u32 16, %s24
        $region40: #{tpu_custom_call.1} parent=35 // pred_fallthru
          _
        // Predicated region
        $region41: #{tpu_custom_call.1} parent=35 // pred_check
          %p260 = pneg %p76
        $region42: #{tpu_custom_call.1} parent=35 // pred_check_branch
          %262 = sbr.rel (%p260) target = $region44
        $region43: #{tpu_custom_call.1} parent=35 // pred_region
          %p263 = scmp.lt.s32.totalorder %s23, 1
          %s264 = scalar_select %p263, %s23, 1
          %s265 = scalar_lea.vmem %s1, %s264
        $region44: #{tpu_custom_call.1} parent=35 // pred_fallthru
          _
      $region36: #{tpu_custom_call.1} parent=5 // pred_fallthru
        _
      %p266 = scmp.le.s32.totalorder 1, %s16
      %p267 = scmp.lt.s32.totalorder %s16, 5
      %p268 = pnand %p266, %p267
      %p269 = pneg %p268
      // Predicated region
      $region45: #{tpu_custom_call.1} parent=5 // pred_check
        _
      $region46: #{tpu_custom_call.1} parent=5 // pred_check_branch
        %271 = sbr.rel (%p268) target = $region48
      $region47: #{tpu_custom_call.1} parent=5 // pred_region
        %s272 = ssub.s32 %s16, 1
        %s273 = smul.u32 16, %s26
        %p274 = scmp.lt.s32.totalorder %s25, 1
        %s275 = scalar_select %p274, %s25, 1
        %p276 = scmp.lt.s32.totalorder %s273, 31
        %s277 = scalar_select %p276, %s273, 31
        %s278 = smul.addr %s275, 32
        %s279 = sadd.s32 %s277, %s278
        %s280 = smul.addr %s279, 4
        %s281 = scalar_lea.vmem %s0, %s280
        %p282 = pneg %p56
        %p283 = pneg %p53
        %p284 = scmp.lt.s32.totalorder %s25, 1
        %s285 = scalar_select %p284, %s25, 1
        %s286 = scalar_lea.vmem %s1, %s285
        %p287 = pneg %p82
        %p288 = pneg %p79
        %p289 = pneg %p103
        %p290 = pneg %p100
        %p291 = pneg %p124
        %p292 = pneg %p121
        %p293 = pneg %p145
        %p294 = pneg %p142
        %p295 = pneg %p166
        %p296 = pneg %p163
        %p297 = pneg %p187
        %p298 = pneg %p184
        %p299 = pneg %p213
        %p300 = pneg %p210
        %s301 = sand.u32 %s200, 1
        %s302 = scalar_lea.sflag [#allocation4], %s301
        %s303 = sand.u32 %s200, 1
        %s304 = smul.addr %s303, 2
        %s305 = scalar_lea.vmem [#allocation3], %s304
        %s306 = smul.u32 16, %s26
        %p307 = scmp.lt.s32.totalorder %s25, 1
        %s308 = scalar_select %p307, %s25, 1
        %p309 = scmp.lt.s32.totalorder %s306, 31
        %s310 = scalar_select %p309, %s306, 31
        %s311 = smul.addr %s308, 32
        %s312 = sadd.s32 %s310, %s311
        %s313 = smul.addr %s312, 4
        %s314 = scalar_lea.vmem %s0, %s313
        %s315 = smul.u32 16, %s26
        %p316 = scmp.lt.s32.totalorder %s25, 1
        %s317 = scalar_select %p316, %s25, 1
        %s318 = scalar_lea.vmem %s1, %s317
        %p320 = scmp.eq.s32.totalorder %s26, 0
        // Predicated region
        $region49: #{tpu_custom_call.1} parent=47 // pred_check
          %p321 = pneg %p320
        $region50: #{tpu_custom_call.1} parent=47 // pred_check_branch
          %323 = sbr.rel (%p321) target = $region52
        $region51: #{tpu_custom_call.1} parent=47 // pred_region
          %v324 = vlaneseq
          %vm325 = vcmp.ge.s32.totalorder %v324, 0
          %vm326 = vcmp.lt.s32.totalorder %v324, 256
          %vm327 = vmand %vm325, %vm326
          %328 = vst.msk [vmem:[#allocation2] sm:$0x3] %vm327, 0.0
        $region52: #{tpu_custom_call.1} parent=47 // pred_fallthru
          _
        %v329 = vld [vmem:[%s314] sm:$0xf]
        %v330 = vld [vmem:[%s314 + $0x4] sm:$0xf]
        %v331 = vld [vmem:[%s314 + $0x8] sm:$0xf]
        %v332 = vld [vmem:[%s314 + $0xc] sm:$0xf]
        %v333 = vld [vmem:[%s314 + $0x10] sm:$0xf]
        %v334 = vld [vmem:[%s314 + $0x14] sm:$0xf]
        %v335 = vld [vmem:[%s314 + $0x18] sm:$0xf]
        %v336 = vld [vmem:[%s314 + $0x1c] sm:$0xf]
        %v337 = vld [vmem:[%s314 + $0x20] sm:$0xf]
        %v338 = vld [vmem:[%s314 + $0x24] sm:$0xf]
        %v339 = vld [vmem:[%s314 + $0x28] sm:$0xf]
        %v340 = vld [vmem:[%s314 + $0x2c] sm:$0xf]
        %v341 = vld [vmem:[%s314 + $0x30] sm:$0xf]
        %v342 = vld [vmem:[%s314 + $0x34] sm:$0xf]
        %v343 = vld [vmem:[%s314 + $0x38] sm:$0xf]
        %v344 = vld [vmem:[%s314 + $0x3c] sm:$0xf]
        %v345 = vunpack.c.l.bf16 %v329
        %v346 = vunpack.c.l.bf16 %v330
        %v347 = vunpack.c.l.bf16 %v331
        %v348 = vunpack.c.l.bf16 %v332
        %v349 = vunpack.c.l.bf16 %v333
        %v350 = vunpack.c.l.bf16 %v334
        %v351 = vunpack.c.l.bf16 %v335
        %v352 = vunpack.c.l.bf16 %v336
        %v353 = vunpack.c.l.bf16 %v337
        %v354 = vunpack.c.l.bf16 %v338
        %v355 = vunpack.c.l.bf16 %v339
        %v356 = vunpack.c.l.bf16 %v340
        %v357 = vunpack.c.l.bf16 %v341
        %v358 = vunpack.c.l.bf16 %v342
        %v359 = vunpack.c.l.bf16 %v343
        %v360 = vunpack.c.l.bf16 %v344
        %v361 = vld [vmem:[%s2] sm:$0x7]
        %363 = vset.pattern.permute.xlu0 0
        %364 = vperm.xlu0 %363, %v345
        %v365 = vpop.permute.xlu0 %364
        %368 = vset.pattern.permute.xlu0 0
        %369 = vperm.xlu0 %368, %v346
        %v370 = vpop.permute.xlu0 %369
        %373 = vset.pattern.permute.xlu0 0
        %374 = vperm.xlu0 %373, %v347
        %v375 = vpop.permute.xlu0 %374
        %378 = vset.pattern.permute.xlu0 0
        %379 = vperm.xlu0 %378, %v348
        %v380 = vpop.permute.xlu0 %379
        %383 = vset.pattern.permute.xlu0 0
        %384 = vperm.xlu0 %383, %v349
        %v385 = vpop.permute.xlu0 %384
        %388 = vset.pattern.permute.xlu0 0
        %389 = vperm.xlu0 %388, %v350
        %v390 = vpop.permute.xlu0 %389
        %393 = vset.pattern.permute.xlu0 0
        %394 = vperm.xlu0 %393, %v351
        %v395 = vpop.permute.xlu0 %394
        %398 = vset.pattern.permute.xlu0 0
        %399 = vperm.xlu0 %398, %v352
        %v400 = vpop.permute.xlu0 %399
        %403 = vset.pattern.permute.xlu0 0
        %404 = vperm.xlu0 %403, %v353
        %v405 = vpop.permute.xlu0 %404
        %408 = vset.pattern.permute.xlu0 0
        %409 = vperm.xlu0 %408, %v354
        %v410 = vpop.permute.xlu0 %409
        %413 = vset.pattern.permute.xlu0 0
        %414 = vperm.xlu0 %413, %v355
        %v415 = vpop.permute.xlu0 %414
        %418 = vset.pattern.permute.xlu0 0
        %419 = vperm.xlu0 %418, %v356
        %v420 = vpop.permute.xlu0 %419
        %423 = vset.pattern.permute.xlu0 0
        %424 = vperm.xlu0 %423, %v357
        %v425 = vpop.permute.xlu0 %424
        %428 = vset.pattern.permute.xlu0 0
        %429 = vperm.xlu0 %428, %v358
        %v430 = vpop.permute.xlu0 %429
        %433 = vset.pattern.permute.xlu0 0
        %434 = vperm.xlu0 %433, %v359
        %v435 = vpop.permute.xlu0 %434
        %438 = vset.pattern.permute.xlu0 0
        %439 = vperm.xlu0 %438, %v360
        %v440 = vpop.permute.xlu0 %439
        %v442 = vlaneseq
        %v443 = vshrl.u32 %v442, 7
        %v444 = vsub.s32 0, %v443
        %v445 = vrot.slane %v361, %v444
        %v446 = vmul.f32 %v365, %v445
        %v447 = vmul.f32 %v370, %v445
        %v448 = vmul.f32 %v375, %v445
        %v449 = vmul.f32 %v380, %v445
        %v450 = vmul.f32 %v385, %v445
        %v451 = vmul.f32 %v390, %v445
        %v452 = vmul.f32 %v395, %v445
        %v453 = vmul.f32 %v400, %v445
        %v454 = vmul.f32 %v405, %v445
        %v455 = vmul.f32 %v410, %v445
        %v456 = vmul.f32 %v415, %v445
        %v457 = vmul.f32 %v420, %v445
        %v458 = vmul.f32 %v425, %v445
        %v459 = vmul.f32 %v430, %v445
        %v460 = vmul.f32 %v435, %v445
        %v461 = vmul.f32 %v440, %v445
        %462 = vset.pattern.permute.xlu0 1
        %463 = vperm.xlu0 %462, %v345
        %v464 = vpop.permute.xlu0 %463
        %466 = vset.pattern.permute.xlu0 1
        %467 = vperm.xlu0 %466, %v346
        %v468 = vpop.permute.xlu0 %467
        %470 = vset.pattern.permute.xlu0 1
        %471 = vperm.xlu0 %470, %v347
        %v472 = vpop.permute.xlu0 %471
        %474 = vset.pattern.permute.xlu0 1
        %475 = vperm.xlu0 %474, %v348
        %v476 = vpop.permute.xlu0 %475
        %478 = vset.pattern.permute.xlu0 1
        %479 = vperm.xlu0 %478, %v349
        %v480 = vpop.permute.xlu0 %479
        %482 = vset.pattern.permute.xlu0 1
        %483 = vperm.xlu0 %482, %v350
        %v484 = vpop.permute.xlu0 %483
        %486 = vset.pattern.permute.xlu0 1
        %487 = vperm.xlu0 %486, %v351
        %v488 = vpop.permute.xlu0 %487
        %490 = vset.pattern.permute.xlu0 1
        %491 = vperm.xlu0 %490, %v352
        %v492 = vpop.permute.xlu0 %491
        %494 = vset.pattern.permute.xlu0 1
        %495 = vperm.xlu0 %494, %v353
        %v496 = vpop.permute.xlu0 %495
        %498 = vset.pattern.permute.xlu0 1
        %499 = vperm.xlu0 %498, %v354
        %v500 = vpop.permute.xlu0 %499
        %502 = vset.pattern.permute.xlu0 1
        %503 = vperm.xlu0 %502, %v355
        %v504 = vpop.permute.xlu0 %503
        %506 = vset.pattern.permute.xlu0 1
        %507 = vperm.xlu0 %506, %v356
        %v508 = vpop.permute.xlu0 %507
        %510 = vset.pattern.permute.xlu0 1
        %511 = vperm.xlu0 %510, %v357
        %v512 = vpop.permute.xlu0 %511
        %514 = vset.pattern.permute.xlu0 1
        %515 = vperm.xlu0 %514, %v358
        %v516 = vpop.permute.xlu0 %515
        %518 = vset.pattern.permute.xlu0 1
        %519 = vperm.xlu0 %518, %v359
        %v520 = vpop.permute.xlu0 %519
        %522 = vset.pattern.permute.xlu0 1
        %523 = vperm.xlu0 %522, %v360
        %v524 = vpop.permute.xlu0 %523
        %v526 = vlaneseq
        %v527 = vshrl.u32 %v526, 7
        %v528 = vsub.s32 1, %v527
        %v529 = vrot.slane %v361, %v528
        %v530 = vmul.f32 %v464, %v529
        %v531 = vmul.f32 %v468, %v529
        %v532 = vmul.f32 %v472, %v529
        %v533 = vmul.f32 %v476, %v529
        %v534 = vmul.f32 %v480, %v529
        %v535 = vmul.f32 %v484, %v529
        %v536 = vmul.f32 %v488, %v529
        %v537 = vmul.f32 %v492, %v529
        %v538 = vmul.f32 %v496, %v529
        %v539 = vmul.f32 %v500, %v529
        %v540 = vmul.f32 %v504, %v529
        %v541 = vmul.f32 %v508, %v529
        %v542 = vmul.f32 %v512, %v529
        %v543 = vmul.f32 %v516, %v529
        %v544 = vmul.f32 %v520, %v529
        %v545 = vmul.f32 %v524, %v529
        %v546 = vadd.f32 %v446, %v530
        %v547 = vadd.f32 %v447, %v531
        %v548 = vadd.f32 %v448, %v532
        %v549 = vadd.f32 %v449, %v533
        %v550 = vadd.f32 %v450, %v534
        %v551 = vadd.f32 %v451, %v535
        %v552 = vadd.f32 %v452, %v536
        %v553 = vadd.f32 %v453, %v537
        %v554 = vadd.f32 %v454, %v538
        %v555 = vadd.f32 %v455, %v539
        %v556 = vadd.f32 %v456, %v540
        %v557 = vadd.f32 %v457, %v541
        %v558 = vadd.f32 %v458, %v542
        %v559 = vadd.f32 %v459, %v543
        %v560 = vadd.f32 %v460, %v544
        %v561 = vadd.f32 %v461, %v545
        %562 = vset.pattern.permute.xlu0 2
        %563 = vperm.xlu0 %562, %v345
        %v564 = vpop.permute.xlu0 %563
        %566 = vset.pattern.permute.xlu0 2
        %567 = vperm.xlu0 %566, %v346
        %v568 = vpop.permute.xlu0 %567
        %570 = vset.pattern.permute.xlu0 2
        %571 = vperm.xlu0 %570, %v347
        %v572 = vpop.permute.xlu0 %571
        %574 = vset.pattern.permute.xlu0 2
        %575 = vperm.xlu0 %574, %v348
        %v576 = vpop.permute.xlu0 %575
        %578 = vset.pattern.permute.xlu0 2
        %579 = vperm.xlu0 %578, %v349
        %v580 = vpop.permute.xlu0 %579
        %582 = vset.pattern.permute.xlu0 2
        %583 = vperm.xlu0 %582, %v350
        %v584 = vpop.permute.xlu0 %583
        %586 = vset.pattern.permute.xlu0 2
        %587 = vperm.xlu0 %586, %v351
        %v588 = vpop.permute.xlu0 %587
        %590 = vset.pattern.permute.xlu0 2
        %591 = vperm.xlu0 %590, %v352
        %v592 = vpop.permute.xlu0 %591
        %594 = vset.pattern.permute.xlu0 2
        %595 = vperm.xlu0 %594, %v353
        %v596 = vpop.permute.xlu0 %595
        %598 = vset.pattern.permute.xlu0 2
        %599 = vperm.xlu0 %598, %v354
        %v600 = vpop.permute.xlu0 %599
        %602 = vset.pattern.permute.xlu0 2
        %603 = vperm.xlu0 %602, %v355
        %v604 = vpop.permute.xlu0 %603
        %606 = vset.pattern.permute.xlu0 2
        %607 = vperm.xlu0 %606, %v356
        %v608 = vpop.permute.xlu0 %607
        %610 = vset.pattern.permute.xlu0 2
        %611 = vperm.xlu0 %610, %v357
        %v612 = vpop.permute.xlu0 %611
        %614 = vset.pattern.permute.xlu0 2
        %615 = vperm.xlu0 %614, %v358
        %v616 = vpop.permute.xlu0 %615
        %618 = vset.pattern.permute.xlu0 2
        %619 = vperm.xlu0 %618, %v359
        %v620 = vpop.permute.xlu0 %619
        %622 = vset.pattern.permute.xlu0 2
        %623 = vperm.xlu0 %622, %v360
        %v624 = vpop.permute.xlu0 %623
        %v626 = vlaneseq
        %v627 = vshrl.u32 %v626, 7
        %v628 = vsub.s32 2, %v627
        %v629 = vrot.slane %v361, %v628
        %v630 = vmul.f32 %v564, %v629
        %v631 = vmul.f32 %v568, %v629
        %v632 = vmul.f32 %v572, %v629
        %v633 = vmul.f32 %v576, %v629
        %v634 = vmul.f32 %v580, %v629
        %v635 = vmul.f32 %v584, %v629
        %v636 = vmul.f32 %v588, %v629
        %v637 = vmul.f32 %v592, %v629
        %v638 = vmul.f32 %v596, %v629
        %v639 = vmul.f32 %v600, %v629
        %v640 = vmul.f32 %v604, %v629
        %v641 = vmul.f32 %v608, %v629
        %v642 = vmul.f32 %v612, %v629
        %v643 = vmul.f32 %v616, %v629
        %v644 = vmul.f32 %v620, %v629
        %v645 = vmul.f32 %v624, %v629
        %v646 = vadd.f32 %v546, %v630
        %v647 = vadd.f32 %v547, %v631
        %v648 = vadd.f32 %v548, %v632
        %v649 = vadd.f32 %v549, %v633
        %v650 = vadd.f32 %v550, %v634
        %v651 = vadd.f32 %v551, %v635
        %v652 = vadd.f32 %v552, %v636
        %v653 = vadd.f32 %v553, %v637
        %v654 = vadd.f32 %v554, %v638
        %v655 = vadd.f32 %v555, %v639
        %v656 = vadd.f32 %v556, %v640
        %v657 = vadd.f32 %v557, %v641
        %v658 = vadd.f32 %v558, %v642
        %v659 = vadd.f32 %v559, %v643
        %v660 = vadd.f32 %v560, %v644
        %v661 = vadd.f32 %v561, %v645
        %v662 = vld [vmem:[%s318] sm:$0x1]
        %v664 = vlaneseq
        %v665 = vshrl.u32 %v664, 7
        %v666 = vsub.s32 0, %v665
        %v667 = vrot.slane %v662, %v666
        %v669 = vadd.f32 %v646, %v667
        %v670 = vadd.f32 %v647, %v667
        %v671 = vadd.f32 %v648, %v667
        %v672 = vadd.f32 %v649, %v667
        %v673 = vadd.f32 %v650, %v667
        %v674 = vadd.f32 %v651, %v667
        %v675 = vadd.f32 %v652, %v667
        %v676 = vadd.f32 %v653, %v667
        %v677 = vadd.f32 %v654, %v667
        %v678 = vadd.f32 %v655, %v667
        %v679 = vadd.f32 %v656, %v667
        %v680 = vadd.f32 %v657, %v667
        %v681 = vadd.f32 %v658, %v667
        %v682 = vadd.f32 %v659, %v667
        %v683 = vadd.f32 %v660, %v667
        %v684 = vadd.f32 %v661, %v667
        %v685 = vmax.f32 %v669, 0.0
        %v686 = vmax.f32 %v670, 0.0
        %v687 = vmax.f32 %v671, 0.0
        %v688 = vmax.f32 %v672, 0.0
        %v689 = vmax.f32 %v673, 0.0
        %v690 = vmax.f32 %v674, 0.0
        %v691 = vmax.f32 %v675, 0.0
        %v692 = vmax.f32 %v676, 0.0
        %v693 = vmax.f32 %v677, 0.0
        %v694 = vmax.f32 %v678, 0.0
        %v695 = vmax.f32 %v679, 0.0
        %v696 = vmax.f32 %v680, 0.0
        %v697 = vmax.f32 %v681, 0.0
        %v698 = vmax.f32 %v682, 0.0
        %v699 = vmax.f32 %v683, 0.0
        %v700 = vmax.f32 %v684, 0.0
        %v701 = vpack.c.bf16 %v686, %v685
        %v702 = vpack.c.bf16 %v688, %v687
        %v703 = vpack.c.bf16 %v690, %v689
        %v704 = vpack.c.bf16 %v692, %v691
        %v705 = vpack.c.bf16 %v694, %v693
        %v706 = vpack.c.bf16 %v696, %v695
        %v707 = vpack.c.bf16 %v698, %v697
        %v708 = vpack.c.bf16 %v700, %v699
        %v709 = vld [vmem:[%s3] sm:$0xf]
        %v710 = vld [vmem:[%s3 + $0x4] sm:$0xf]
        %v711 = vld [vmem:[%s3 + $0x8] sm:$0xf]
        %v712 = vld [vmem:[%s3 + $0xc] sm:$0xf]
        %v713 = vld [vmem:[%s3 + $0x10] sm:$0xf]
        %v714 = vld [vmem:[%s3 + $0x14] sm:$0xf]
        %v715 = vld [vmem:[%s3 + $0x18] sm:$0xf]
        %v716 = vld [vmem:[%s3 + $0x1c] sm:$0xf]
        %v717 = vld [vmem:[%s4] sm:$0x1]
        %v719 = vlaneseq
        %v720 = vshrl.u32 %v719, 7
        %v721 = vsub.s32 0, %v720
        %v722 = vrot.slane %v717, %v721
        %v732 = vunpack.c.l.b16 %v709
        %v733 = vunpack.c.l.b16 %v710
        %v734 = vunpack.c.l.b16 %v711
        %v735 = vunpack.c.l.b16 %v712
        %v736 = vunpack.c.l.b16 %v713
        %v737 = vunpack.c.l.b16 %v714
        %v738 = vunpack.c.l.b16 %v715
        %v739 = vunpack.c.l.b16 %v716
        %v740 = vpack.c.b16 %v733, %v732
        %v741 = vpack.c.b16 %v735, %v734
        %v742 = vpack.c.b16 %v737, %v736
        %v743 = vpack.c.b16 %v739, %v738
        %vm748 = vcmask 523264
        %v750 = vsel %vm748, %v701, 0
        %v753 = vsel %vm748, %v702, 0
        %v756 = vsel %vm748, %v703, 0
        %v759 = vsel %vm748, %v704, 0
        %v762 = vsel %vm748, %v705, 0
        %v765 = vsel %vm748, %v706, 0
        %v768 = vsel %vm748, %v707, 0
        %v771 = vsel %vm748, %v708, 0
        %773 = vmatprep.subr.bf16.mxu0 0
        %774 = vmatpush1.bf16.msra.mxu0 %v740
        %775 = vmatprep.subr.bf16.mxu0 0
        %776 = vmatpush1.bf16.msra.mxu0 %v741
        %777 = vmatprep.subr.bf16.mxu0 0
        %778 = vmatpush1.bf16.msra.mxu0 %v742
        %779 = vmatprep.subr.bf16.mxu0 0
        %780 = vmatpush1.bf16.msra.mxu0 %v743
        %781 = vmatprep.subr.bf16.mxu0 0
        %782 = vmatpush1.bf16.msra.mxu0 0
        %783 = vmatprep.subr.bf16.mxu0 0
        %784 = vmatpush1.bf16.msra.mxu0 0
        %785 = vmatprep.subr.bf16.mxu0 0
        %786 = vmatpush1.bf16.msra.mxu0 0
        %787 = vmatprep.subr.bf16.mxu0 0
        %788 = vmatpush1.bf16.msra.mxu0 0
        %789 = vmatprep.subr.bf16.mxu0 0
        %790 = vmatpush1.bf16.msra.mxu0 0
        %791 = vmatprep.subr.bf16.mxu0 0
        %792 = vmatpush1.bf16.msra.mxu0 0
        %793 = vmatprep.subr.bf16.mxu0 0
        %794 = vmatpush1.bf16.msra.mxu0 0
        %795 = vmatprep.subr.bf16.mxu0 0
        %796 = vmatpush1.bf16.msra.mxu0 0
        %797 = vmatprep.subr.bf16.mxu0 0
        %798 = vmatpush1.bf16.msra.mxu0 0
        %799 = vmatprep.subr.bf16.mxu0 0
        %800 = vmatpush1.bf16.msra.mxu0 0
        %801 = vmatprep.subr.bf16.mxu0 0
        %802 = vmatpush1.bf16.msra.mxu0 0
        %803 = vmatprep.subr.bf16.mxu0 0
        %804 = vmatpush1.bf16.msra.mxu0 0
        %805 = vmatprep.mubr.bf16.mxu0 0
        %806 = vmatmul.mubr.bf16.gmra.mrb[0].mxu0 %v750
        %v807 = vpop.f32.mrb[0].mxu0
        %v808 = vadd.f32 %v722, %v807
        %v809 = vpop.f32.mrb[0].mxu0
        %v810 = vpop.f32.mrb[0].mxu0
        %v811 = vadd.f32 %v722, %v810
        %v812 = vpop.f32.mrb[0].mxu0
        %813 = vmatprep.mubr.bf16.mxu0 0
        %814 = vmatmul.mubr.bf16.gmra.mrb[0].mxu0 %v753
        %v815 = vpop.f32.mrb[0].mxu0
        %v816 = vadd.f32 %v722, %v815
        %v817 = vpop.f32.mrb[0].mxu0
        %v818 = vpop.f32.mrb[0].mxu0
        %v819 = vadd.f32 %v722, %v818
        %v820 = vpop.f32.mrb[0].mxu0
        %821 = vmatprep.mubr.bf16.mxu0 0
        %822 = vmatmul.mubr.bf16.gmra.mrb[0].mxu0 %v756
        %v823 = vpop.f32.mrb[0].mxu0
        %v824 = vadd.f32 %v722, %v823
        %v825 = vpop.f32.mrb[0].mxu0
        %v826 = vpop.f32.mrb[0].mxu0
        %v827 = vadd.f32 %v722, %v826
        %v828 = vpop.f32.mrb[0].mxu0
        %829 = vmatprep.mubr.bf16.mxu0 0
        %830 = vmatmul.mubr.bf16.gmra.mrb[0].mxu0 %v759
        %v831 = vpop.f32.mrb[0].mxu0
        %v832 = vadd.f32 %v722, %v831
        %v833 = vpop.f32.mrb[0].mxu0
        %v834 = vpop.f32.mrb[0].mxu0
        %v835 = vadd.f32 %v722, %v834
        %v836 = vpop.f32.mrb[0].mxu0
        %837 = vmatprep.mubr.bf16.mxu0 0
        %838 = vmatmul.mubr.bf16.gmra.mrb[0].mxu0 %v762
        %v839 = vpop.f32.mrb[0].mxu0
        %v840 = vadd.f32 %v722, %v839
        %v841 = vpop.f32.mrb[0].mxu0
        %v842 = vpop.f32.mrb[0].mxu0
        %v843 = vadd.f32 %v722, %v842
        %v844 = vpop.f32.mrb[0].mxu0
        %845 = vmatprep.mubr.bf16.mxu0 0
        %846 = vmatmul.mubr.bf16.gmra.mrb[0].mxu0 %v765
        %v847 = vpop.f32.mrb[0].mxu0
        %v848 = vadd.f32 %v722, %v847
        %v849 = vpop.f32.mrb[0].mxu0
        %v850 = vpop.f32.mrb[0].mxu0
        %v851 = vadd.f32 %v722, %v850
        %v852 = vpop.f32.mrb[0].mxu0
        %853 = vmatprep.mubr.bf16.mxu0 0
        %854 = vmatmul.mubr.bf16.gmra.mrb[0].mxu0 %v768
        %v855 = vpop.f32.mrb[0].mxu0
        %v856 = vadd.f32 %v722, %v855
        %v857 = vpop.f32.mrb[0].mxu0
        %v858 = vpop.f32.mrb[0].mxu0
        %v859 = vadd.f32 %v722, %v858
        %v860 = vpop.f32.mrb[0].mxu0
        %861 = vmatprep.mubr.bf16.mxu0 0
        %862 = vmatmul.mubr.bf16.gmra.mrb[0].mxu0 %v771
        %v863 = vpop.f32.mrb[0].mxu0
        %v864 = vadd.f32 %v722, %v863
        %v865 = vpop.f32.mrb[0].mxu0
        %v866 = vpop.f32.mrb[0].mxu0
        %v867 = vadd.f32 %v722, %v866
        %v868 = vpop.f32.mrb[0].mxu0
        %869 = vdwg.mxu0
        %v870 = vmax.f32 %v808, 0.0
        %v871 = vmax.f32 %v811, 0.0
        %v872 = vmax.f32 %v816, 0.0
        %v873 = vmax.f32 %v819, 0.0
        %v874 = vmax.f32 %v824, 0.0
        %v875 = vmax.f32 %v827, 0.0
        %v876 = vmax.f32 %v832, 0.0
        %v877 = vmax.f32 %v835, 0.0
        %v878 = vmax.f32 %v840, 0.0
        %v879 = vmax.f32 %v843, 0.0
        %v880 = vmax.f32 %v848, 0.0
        %v881 = vmax.f32 %v851, 0.0
        %v882 = vmax.f32 %v856, 0.0
        %v883 = vmax.f32 %v859, 0.0
        %v884 = vmax.f32 %v864, 0.0
        %v885 = vmax.f32 %v867, 0.0
        %v886 = vpack.c.bf16 %v871, %v870
        %v887 = vpack.c.bf16 %v873, %v872
        %v888 = vpack.c.bf16 %v875, %v874
        %v889 = vpack.c.bf16 %v877, %v876
        %v890 = vpack.c.bf16 %v879, %v878
        %v891 = vpack.c.bf16 %v881, %v880
        %v892 = vpack.c.bf16 %v883, %v882
        %v893 = vpack.c.bf16 %v885, %v884
        %v894 = vld [vmem:[%s5] sm:$0xff]
        %v895 = vld [vmem:[%s5 + $0x8] sm:$0xff]
        %v896 = vld [vmem:[%s5 + $0x10] sm:$0xff]
        %v897 = vld [vmem:[%s5 + $0x18] sm:$0xff]
        %v898 = vld [vmem:[%s5 + $0x20] sm:$0xff]
        %v899 = vld [vmem:[%s5 + $0x28] sm:$0xff]
        %v900 = vld [vmem:[%s5 + $0x30] sm:$0xff]
        %v901 = vld [vmem:[%s5 + $0x38] sm:$0xff]
        %v902 = vld [vmem:[%s5 + $0x40] sm:$0xff]
        %v903 = vld [vmem:[%s5 + $0x48] sm:$0xff]
        %v904 = vld [vmem:[%s5 + $0x50] sm:$0xff]
        %v905 = vld [vmem:[%s5 + $0x58] sm:$0xff]
        %v906 = vld [vmem:[%s5 + $0x60] sm:$0xff]
        %v907 = vld [vmem:[%s5 + $0x68] sm:$0xff]
        %v908 = vld [vmem:[%s5 + $0x70] sm:$0xff]
        %v909 = vld [vmem:[%s5 + $0x78] sm:$0xff]
        %v910 = vld [vmem:[%s6] sm:$0x3]
        %v912 = vlaneseq
        %v913 = vshrl.u32 %v912, 7
        %v914 = vsub.s32 0, %v913
        %v915 = vrot.slane %v910, %v914
        %v916 = vlaneseq
        %v917 = vshrl.u32 %v916, 7
        %v918 = vsub.s32 1, %v917
        %v919 = vrot.slane %v910, %v918
        %v938 = vunpack.c.l.b16 %v894
        %v939 = vunpack.c.h.b16 %v894
        %v940 = vunpack.c.l.b16 %v895
        %v941 = vunpack.c.h.b16 %v895
        %v942 = vunpack.c.l.b16 %v896
        %v943 = vunpack.c.h.b16 %v896
        %v944 = vunpack.c.l.b16 %v897
        %v945 = vunpack.c.h.b16 %v897
        %v946 = vunpack.c.l.b16 %v898
        %v947 = vunpack.c.h.b16 %v898
        %v948 = vunpack.c.l.b16 %v899
        %v949 = vunpack.c.h.b16 %v899
        %v950 = vunpack.c.l.b16 %v900
        %v951 = vunpack.c.h.b16 %v900
        %v952 = vunpack.c.l.b16 %v901
        %v953 = vunpack.c.h.b16 %v901
        %v954 = vunpack.c.l.b16 %v902
        %v955 = vunpack.c.h.b16 %v902
        %v956 = vunpack.c.l.b16 %v903
        %v957 = vunpack.c.h.b16 %v903
        %v958 = vunpack.c.l.b16 %v904
        %v959 = vunpack.c.h.b16 %v904
        %v960 = vunpack.c.l.b16 %v905
        %v961 = vunpack.c.h.b16 %v905
        %v962 = vunpack.c.l.b16 %v906
        %v963 = vunpack.c.h.b16 %v906
        %v964 = vunpack.c.l.b16 %v907
        %v965 = vunpack.c.h.b16 %v907
        %v966 = vunpack.c.l.b16 %v908
        %v967 = vunpack.c.h.b16 %v908
        %v968 = vunpack.c.l.b16 %v909
        %v969 = vunpack.c.h.b16 %v909
        %v970 = vpack.c.b16 %v940, %v938
        %v971 = vpack.c.b16 %v941, %v939
        %v972 = vpack.c.b16 %v944, %v942
        %v973 = vpack.c.b16 %v945, %v943
        %v974 = vpack.c.b16 %v948, %v946
        %v975 = vpack.c.b16 %v949, %v947
        %v976 = vpack.c.b16 %v952, %v950
        %v977 = vpack.c.b16 %v953, %v951
        %v978 = vpack.c.b16 %v956, %v954
        %v979 = vpack.c.b16 %v957, %v955
        %v980 = vpack.c.b16 %v960, %v958
        %v981 = vpack.c.b16 %v961, %v959
        %v982 = vpack.c.b16 %v964, %v962
        %v983 = vpack.c.b16 %v965, %v963
        %v984 = vpack.c.b16 %v968, %v966
        %v985 = vpack.c.b16 %v969, %v967
        %1002 = vmatprep.subr.bf16.mxu0 %v971
        %1003 = vmatpush1.bf16.msra.mxu0 %v970
        %1004 = vmatprep.subr.bf16.mxu0 %v973
        %1005 = vmatpush1.bf16.msra.mxu0 %v972
        %1006 = vmatprep.subr.bf16.mxu0 %v975
        %1007 = vmatpush1.bf16.msra.mxu0 %v974
        %1008 = vmatprep.subr.bf16.mxu0 %v977
        %1009 = vmatpush1.bf16.msra.mxu0 %v976
        %1010 = vmatprep.subr.bf16.mxu0 %v979
        %1011 = vmatpush1.bf16.msra.mxu0 %v978
        %1012 = vmatprep.subr.bf16.mxu0 %v981
        %1013 = vmatpush1.bf16.msra.mxu0 %v980
        %1014 = vmatprep.subr.bf16.mxu0 %v983
        %1015 = vmatpush1.bf16.msra.mxu0 %v982
        %1016 = vmatprep.subr.bf16.mxu0 %v985
        %1017 = vmatpush1.bf16.msra.mxu0 %v984
        %1018 = vmatprep.subr.bf16.mxu0 0
        %1019 = vmatpush1.bf16.msra.mxu0 0
        %1020 = vmatprep.subr.bf16.mxu0 0
        %1021 = vmatpush1.bf16.msra.mxu0 0
        %1022 = vmatprep.subr.bf16.mxu0 0
        %1023 = vmatpush1.bf16.msra.mxu0 0
        %1024 = vmatprep.subr.bf16.mxu0 0
        %1025 = vmatpush1.bf16.msra.mxu0 0
        %1026 = vmatprep.subr.bf16.mxu0 0
        %1027 = vmatpush1.bf16.msra.mxu0 0
        %1028 = vmatprep.subr.bf16.mxu0 0
        %1029 = vmatpush1.bf16.msra.mxu0 0
        %1030 = vmatprep.subr.bf16.mxu0 0
        %1031 = vmatpush1.bf16.msra.mxu0 0
        %1032 = vmatprep.subr.bf16.mxu0 0
        %1033 = vmatpush1.bf16.msra.mxu0 0
        %1034 = vmatprep.mubr.bf16.mxu0 0
        %1035 = vmatmul.mubr.bf16.gmra.mrb[0].mxu0 %v886
        %v1036 = vpop.f32.mrb[0].mxu0
        %v1037 = vadd.f32 %v915, %v1036
        %v1038 = vpop.f32.mrb[0].mxu0
        %v1039 = vadd.f32 %v919, %v1038
        %v1040 = vpop.f32.mrb[0].mxu0
        %v1041 = vadd.f32 %v915, %v1040
        %v1042 = vpop.f32.mrb[0].mxu0
        %v1043 = vadd.f32 %v919, %v1042
        %1044 = vmatprep.mubr.bf16.mxu0 0
        %1045 = vmatmul.mubr.bf16.gmra.mrb[0].mxu0 %v887
        %v1046 = vpop.f32.mrb[0].mxu0
        %v1047 = vadd.f32 %v915, %v1046
        %v1048 = vpop.f32.mrb[0].mxu0
        %v1049 = vadd.f32 %v919, %v1048
        %v1050 = vpop.f32.mrb[0].mxu0
        %v1051 = vadd.f32 %v915, %v1050
        %v1052 = vpop.f32.mrb[0].mxu0
        %v1053 = vadd.f32 %v919, %v1052
        %1054 = vmatprep.mubr.bf16.mxu0 0
        %1055 = vmatmul.mubr.bf16.gmra.mrb[0].mxu0 %v888
        %v1056 = vpop.f32.mrb[0].mxu0
        %v1057 = vadd.f32 %v915, %v1056
        %v1058 = vpop.f32.mrb[0].mxu0
        %v1059 = vadd.f32 %v919, %v1058
        %v1060 = vpop.f32.mrb[0].mxu0
        %v1061 = vadd.f32 %v915, %v1060
        %v1062 = vpop.f32.mrb[0].mxu0
        %v1063 = vadd.f32 %v919, %v1062
        %1064 = vmatprep.mubr.bf16.mxu0 0
        %1065 = vmatmul.mubr.bf16.gmra.mrb[0].mxu0 %v889
        %v1066 = vpop.f32.mrb[0].mxu0
        %v1067 = vadd.f32 %v915, %v1066
        %v1068 = vpop.f32.mrb[0].mxu0
        %v1069 = vadd.f32 %v919, %v1068
        %v1070 = vpop.f32.mrb[0].mxu0
        %v1071 = vadd.f32 %v915, %v1070
        %v1072 = vpop.f32.mrb[0].mxu0
        %v1073 = vadd.f32 %v919, %v1072
        %1074 = vmatprep.mubr.bf16.mxu0 0
        %1075 = vmatmul.mubr.bf16.gmra.mrb[0].mxu0 %v890
        %v1076 = vpop.f32.mrb[0].mxu0
        %v1077 = vadd.f32 %v915, %v1076
        %v1078 = vpop.f32.mrb[0].mxu0
        %v1079 = vadd.f32 %v919, %v1078
        %v1080 = vpop.f32.mrb[0].mxu0
        %v1081 = vadd.f32 %v915, %v1080
        %v1082 = vpop.f32.mrb[0].mxu0
        %v1083 = vadd.f32 %v919, %v1082
        %1084 = vmatprep.mubr.bf16.mxu0 0
        %1085 = vmatmul.mubr.bf16.gmra.mrb[0].mxu0 %v891
        %v1086 = vpop.f32.mrb[0].mxu0
        %v1087 = vadd.f32 %v915, %v1086
        %v1088 = vpop.f32.mrb[0].mxu0
        %v1089 = vadd.f32 %v919, %v1088
        %v1090 = vpop.f32.mrb[0].mxu0
        %v1091 = vadd.f32 %v915, %v1090
        %v1092 = vpop.f32.mrb[0].mxu0
        %v1093 = vadd.f32 %v919, %v1092
        %1094 = vmatprep.mubr.bf16.mxu0 0
        %1095 = vmatmul.mubr.bf16.gmra.mrb[0].mxu0 %v892
        %v1096 = vpop.f32.mrb[0].mxu0
        %v1097 = vadd.f32 %v915, %v1096
        %v1098 = vpop.f32.mrb[0].mxu0
        %v1099 = vadd.f32 %v919, %v1098
        %v1100 = vpop.f32.mrb[0].mxu0
        %v1101 = vadd.f32 %v915, %v1100
        %v1102 = vpop.f32.mrb[0].mxu0
        %v1103 = vadd.f32 %v919, %v1102
        %1104 = vmatprep.mubr.bf16.mxu0 0
        %1105 = vmatmul.mubr.bf16.gmra.mrb[0].mxu0 %v893
        %v1106 = vpop.f32.mrb[0].mxu0
        %v1107 = vadd.f32 %v915, %v1106
        %v1108 = vpop.f32.mrb[0].mxu0
        %v1109 = vadd.f32 %v919, %v1108
        %v1110 = vpop.f32.mrb[0].mxu0
        %v1111 = vadd.f32 %v915, %v1110
        %v1112 = vpop.f32.mrb[0].mxu0
        %v1113 = vadd.f32 %v919, %v1112
        %1114 = vdwg.mxu0
        %v1115 = vmax.f32 %v1037, 0.0
        %v1116 = vmax.f32 %v1039, 0.0
        %v1117 = vmax.f32 %v1041, 0.0
        %v1118 = vmax.f32 %v1043, 0.0
        %v1119 = vmax.f32 %v1047, 0.0
        %v1120 = vmax.f32 %v1049, 0.0
        %v1121 = vmax.f32 %v1051, 0.0
        %v1122 = vmax.f32 %v1053, 0.0
        %v1123 = vmax.f32 %v1057, 0.0
        %v1124 = vmax.f32 %v1059, 0.0
        %v1125 = vmax.f32 %v1061, 0.0
        %v1126 = vmax.f32 %v1063, 0.0
        %v1127 = vmax.f32 %v1067, 0.0
        %v1128 = vmax.f32 %v1069, 0.0
        %v1129 = vmax.f32 %v1071, 0.0
        %v1130 = vmax.f32 %v1073, 0.0
        %v1131 = vmax.f32 %v1077, 0.0
        %v1132 = vmax.f32 %v1079, 0.0
        %v1133 = vmax.f32 %v1081, 0.0
        %v1134 = vmax.f32 %v1083, 0.0
        %v1135 = vmax.f32 %v1087, 0.0
        %v1136 = vmax.f32 %v1089, 0.0
        %v1137 = vmax.f32 %v1091, 0.0
        %v1138 = vmax.f32 %v1093, 0.0
        %v1139 = vmax.f32 %v1097, 0.0
        %v1140 = vmax.f32 %v1099, 0.0
        %v1141 = vmax.f32 %v1101, 0.0
        %v1142 = vmax.f32 %v1103, 0.0
        %v1143 = vmax.f32 %v1107, 0.0
        %v1144 = vmax.f32 %v1109, 0.0
        %v1145 = vmax.f32 %v1111, 0.0
        %v1146 = vmax.f32 %v1113, 0.0
        %v1147 = vld [vmem:[#allocation2] sm:$0x3]
        %v1148 = vadd.f32 %v1115, %v1117
        %v1149 = vadd.f32 %v1148, %v1119
        %v1150 = vadd.f32 %v1149, %v1121
        %v1151 = vadd.f32 %v1150, %v1123
        %v1152 = vadd.f32 %v1151, %v1125
        %v1153 = vadd.f32 %v1152, %v1127
        %v1154 = vadd.f32 %v1153, %v1129
        %v1155 = vadd.f32 %v1154, %v1131
        %v1156 = vadd.f32 %v1155, %v1133
        %v1157 = vadd.f32 %v1156, %v1135
        %v1158 = vadd.f32 %v1157, %v1137
        %v1159 = vadd.f32 %v1158, %v1139
        %v1160 = vadd.f32 %v1159, %v1141
        %v1161 = vadd.f32 %v1160, %v1143
        %v1162 = vadd.f32 %v1161, %v1145
        %v1163 = vrot.slane %v1162, 4
        %v1164 = vadd.f32 %v1162, %v1163
        %v1165 = vrot.slane %v1164, 2
        %v1166 = vadd.f32 %v1164, %v1165
        %v1167 = vrot.slane %v1166, 1
        %v1168 = vadd.f32 %v1166, %v1167
        %v1169 = vadd.f32 %v1116, %v1118
        %v1170 = vadd.f32 %v1169, %v1120
        %v1171 = vadd.f32 %v1170, %v1122
        %v1172 = vadd.f32 %v1171, %v1124
        %v1173 = vadd.f32 %v1172, %v1126
        %v1174 = vadd.f32 %v1173, %v1128
        %v1175 = vadd.f32 %v1174, %v1130
        %v1176 = vadd.f32 %v1175, %v1132
        %v1177 = vadd.f32 %v1176, %v1134
        %v1178 = vadd.f32 %v1177, %v1136
        %v1179 = vadd.f32 %v1178, %v1138
        %v1180 = vadd.f32 %v1179, %v1140
        %v1181 = vadd.f32 %v1180, %v1142
        %v1182 = vadd.f32 %v1181, %v1144
        %v1183 = vadd.f32 %v1182, %v1146
        %v1184 = vrot.slane %v1183, 4
        %v1185 = vadd.f32 %v1183, %v1184
        %v1186 = vrot.slane %v1185, 2
        %v1187 = vadd.f32 %v1185, %v1186
        %v1188 = vrot.slane %v1187, 1
        %v1189 = vadd.f32 %v1187, %v1188
        %v1192 = vcombine.low %v1168, %v1189
        %v1194 = vunpack.c.l.s4 1966171168
        %v1195 = vunpack.c.0.s8 %v1194
        %v1196 = vlaneseq
        %v1197 = vshrl.u32 %v1196, 7
        %v1198 = vsub.s32 %v1195, %v1197
        %v1199 = vrot.slane %v1192, %v1198
        %v1201 = vunpack.c.l.s4 1966171168
        %v1202 = vunpack.c.0.s8 %v1201
        %v1203 = vlaneseq
        %v1204 = vshrl.u32 %v1203, 7
        %v1205 = vsub.s32 %v1202, %v1204
        %v1206 = vrot.slane %v1199, %v1205
        %v1208 = vadd.f32 %v1147, %v1206
        %v1209 = vlaneseq
        %vm1210 = vcmp.ge.s32.totalorder %v1209, 0
        %vm1211 = vcmp.lt.s32.totalorder %v1209, 256
        %vm1212 = vmand %vm1210, %vm1211
        %1213 = vst.msk [vmem:[#allocation2] sm:$0x3] %vm1212, %v1208
        %p1214 = scmp.eq.s32.totalorder %s26, 1
        // Predicated region
        $region53: #{tpu_custom_call.1} parent=47 // pred_check
          %p1215 = pneg %p1214
        $region54: #{tpu_custom_call.1} parent=47 // pred_check_branch
          %1217 = sbr.rel (%p1215) target = $region56
        $region55: #{tpu_custom_call.1} parent=47 // pred_region
          %v1218 = vld [vmem:[#allocation2] sm:$0x3]
          %v1219 = vmul.f32 %v1218, 0.00390625
          %1220 = vst.msk [vmem:[%s305] sm:$0x3] %vm1212, %v1219
        $region56: #{tpu_custom_call.1} parent=47 // pred_fallthru
          _
        %s1221 = sand.u32 %s200, 1
        %s1222 = scalar_lea.sflag [#allocation4], %s1221
        %s1223 = sand.u32 %s200, 1
        %s1224 = smul.addr %s1223, 2
        %s1225 = scalar_lea.vmem [#allocation3], %s1224
        // Predicated region
        $region57: #{tpu_custom_call.1} parent=47 // pred_check
          %p1226 = pneg %p210
        $region58: #{tpu_custom_call.1} parent=47 // pred_check_branch
          %1228 = sbr.rel (%p1226) target = $region60
        $region59: #{tpu_custom_call.1} parent=47 // pred_region
          %s1230 = ssub.s32 32, 32
          %1231 = vsyncadd %s1222, %s1230
          %s1232 = smul.addr %s25, 2
          %s1233 = smul.addr %s1232, 16
          %s1234 = scalar_lea.hbm %s7, %s1233
          %s1236 = sshll.u32 %s1225, 4
          %s1237 = int_to_ptr.vmem [resolvable:$true] %s1236
          %1239 = dma.vmem_to_hbm [thread:$0]  %s1237, 32, %s1234, %s1222
        $region60: #{tpu_custom_call.1} parent=47 // pred_fallthru
          _
      $region48: #{tpu_custom_call.1} parent=5 // pred_fallthru
        _
      %p1240 = scmp.le.s32.totalorder 2, %s16
      // Predicated region
      $region61: #{tpu_custom_call.1} parent=5 // pred_check
        %p1241 = pneg %p1240
      $region62: #{tpu_custom_call.1} parent=5 // pred_check_branch
        %1243 = sbr.rel (%p1241) target = $region64
      $region63: #{tpu_custom_call.1} parent=5 // pred_region
        %s1244 = ssub.s32 %s16, 2
        // Predicated region
        $region65: #{tpu_custom_call.1} parent=63 // pred_check
          %p1245 = pneg %p216
        $region66: #{tpu_custom_call.1} parent=63 // pred_check_branch
          %1247 = sbr.rel (%p1245) target = $region68
        $region67: #{tpu_custom_call.1} parent=63 // pred_region
          %s1248 = sand.u32 %s201, 1
          %s1249 = scalar_lea.sflag [#allocation4], %s1248
          %s1250 = sand.u32 %s201, 1
          %s1251 = smul.addr %s1250, 2
          %s1252 = scalar_lea.vmem [#allocation3], %s1251
          %1253 = dma.done %s1249, 32
        $region68: #{tpu_custom_call.1} parent=63 // pred_fallthru
          _
      $region64: #{tpu_custom_call.1} parent=5 // pred_fallthru
        _
    $region6: #{tpu_custom_call.1} parent=1 // loop_footer
      %s20 = sadd.s32 1, %s16
    $region7: #{tpu_custom_call.1} parent=1 // loop_footer_branch
      %15 = sbr.rel target = $region3
    $region8: #{tpu_custom_call.1} parent=1 // loop_exit
      _
    %1254 = vsyncpa [#allocation4], 1
    %s1255 = scalar_lea.sflag [#allocation4], 1
    %1256 = vsyncpa %s1255, 1

</llo_original>
